<compile_context>
chip_gen: v7x
topology: tpu7x:2x2x1
jax: 0.10.0
libtpu: 0.0.40
codegen_flags: <defaults>
</compile_context>

<pallas_src>
import jax
import jax.numpy as jnp
from jax import lax
from jax.experimental import pallas as pl
from jax.experimental.pallas import tpu as pltpu

IN_FEATURES = 7
OUT_FEATURES = 3
_LANE = 128


def _round_up(n, m):
    return ((n + m - 1) // m) * m


def _linear_kernel(b_ref, x_ref, w_ref, o_ref):
    # b_ref: SMEM (3,)  f32   (scalar-prefetched bias)
    # x_ref: VMEM (TB, 7)     (batch-major activation tile)
    # w_ref: VMEM (3, 7)      (PyTorch nn.Linear weight layout, resident)
    # o_ref: VMEM (3, TB)     (lane-dense, feature-major output tile)
    x = x_ref[...]
    w = w_ref[...]
    # (3, 7) contracted with (TB, 7) on the feature axis -> (3, TB).
    yt = lax.dot_general(
        w, x,
        dimension_numbers=(((1,), (1,)), ((), ())),
        preferred_element_type=jnp.float32)
    # Add bias per output row (3 scalars read from SMEM) and store lane-dense rows.
    for o in range(OUT_FEATURES):
        o_ref[pl.ds(o, 1), :] = (yt[o:o + 1, :] + b_ref[o]).astype(o_ref.dtype)


def linear_model_7(x, weight, bias, *, block_b=2048):
    """Forward pass of Linear_model_7 (nn.Linear(7, 3)).

    Args:
      x:      (B, 7) float32
      weight: (3, 7) float32  (PyTorch layout: out_features x in_features)
      bias:   (3,)   float32
      block_b: batch tile size; rounded to a multiple of 128.
    Returns:
      (B, 3) float32
    """
    # NOTE: for genuinely tiny batches (B < ~128) a plain `x @ weight.T + bias`
    # fused by XLA beats the custom-call launch overhead; the Pallas path is
    # always taken here so the kernel is exercised.
    B = x.shape[0]
    assert x.shape[1] == IN_FEATURES
    x = x.astype(jnp.float32)
    weight = weight.astype(jnp.float32)
    bias = bias.astype(jnp.float32)

    tb = _round_up(min(block_b, _round_up(B, _LANE)), _LANE)
    b_pad = _round_up(B, tb)
    if b_pad != B:
        x = jnp.pad(x, ((0, b_pad - B), (0, 0)))
    n_tiles = pl.cdiv(b_pad, tb)

    y_t = pl.pallas_call(
        _linear_kernel,
        out_shape=jax.ShapeDtypeStruct((OUT_FEATURES, b_pad), jnp.float32),
        grid_spec=pltpu.PrefetchScalarGridSpec(
            num_scalar_prefetch=1,  # bias -> SMEM, passed to index_maps too
            grid=(n_tiles,),
            in_specs=[
                pl.BlockSpec((tb, IN_FEATURES), lambda i, b: (i, 0)),
                pl.BlockSpec((OUT_FEATURES, IN_FEATURES), lambda i, b: (0, 0)),
            ],
            out_specs=pl.BlockSpec((OUT_FEATURES, tb), lambda i, b: (0, i)),
        ),
        compiler_params=pltpu.CompilerParams(
            dimension_semantics=("parallel",)),  # v7x: shard batch tiles over 2 TCs
    )(bias, x, weight)

    # Layout plumbing back to the nn.Linear batch-major convention.
    return y_t[:, :B].T


if __name__ == "__main__":
    key = jax.random.PRNGKey(0)
    kx, kw, kb = jax.random.split(key, 3)

    # Batch deliberately not a multiple of the tile: exercises padding, a
    # multi-step pipelined grid (1000 -> pad 1024 = 4 tiles of 256), and the
    # lane-dense output path.
    batch = 1000
    x = jax.random.normal(kx, (batch, IN_FEATURES), dtype=jnp.float32)

    # Deterministic parameter init mimicking PyTorch nn.Linear default:
    # uniform(-1/sqrt(in_features), 1/sqrt(in_features))
    bound = 1.0 / (IN_FEATURES ** 0.5)
    weight = jax.random.uniform(
        kw, (OUT_FEATURES, IN_FEATURES), dtype=jnp.float32,
        minval=-bound, maxval=bound)
    bias = jax.random.uniform(
        kb, (OUT_FEATURES,), dtype=jnp.float32, minval=-bound, maxval=bound)

    y = linear_model_7(x, weight, bias, block_b=256)
    y = jax.block_until_ready(y)

    # Reference check against plain JAX.
    y_ref = x @ weight.T + bias
    assert y.shape == (batch, OUT_FEATURES)
    assert jnp.allclose(y, y_ref, atol=1e-5, rtol=1e-5)

    print("KERNEL_OK")
</pallas_src>

<mosaic_0001>
module attributes {stable_mosaic.version = 11 : i64} {
  func.func @_linear_kernel(%arg0: i32, %arg1: memref<3xf32, #tpu.memory_space<smem>>, %arg2: memref<256x7xf32, #tpu.memory_space<vmem>>, %arg3: memref<3x7xf32, #tpu.memory_space<vmem>>, %arg4: memref<3x256xf32, #tpu.memory_space<vmem>>) attributes {dimension_semantics = [#tpu.dimension_semantics<parallel>], iteration_bounds = array<i64: 4>, scalar_prefetch = 1 : i64, scratch_operands = 0 : i64, tpu.core_type = #tpu.core_type<tc>, window_params = [{transform_indices = @transform_0, window_bounds = array<i64: 256, 7>}, {pipeline_mode = #tpu.pipeline_mode<synchronous>, transform_indices = @transform_1, window_bounds = array<i64: 3, 7>}, {transform_indices = @transform_2, window_bounds = array<i64: 3, 256>}]} {
    %c0 = arith.constant 0 : index
    %c0_0 = arith.constant 0 : index
    %0 = vector.load %arg2[%c0, %c0_0] : memref<256x7xf32, #tpu.memory_space<vmem>>, vector<256x7xf32>
    %c0_1 = arith.constant 0 : index
    %c0_2 = arith.constant 0 : index
    %1 = vector.load %arg3[%c0_1, %c0_2] : memref<3x7xf32, #tpu.memory_space<vmem>>, vector<3x7xf32>
    %cst = arith.constant dense<0.000000e+00> : vector<3x256xf32>
    %2 = tpu.matmul %1, %0, %cst {dimension_numbers = #tpu.dot_dimension_numbers<[1], [1], [0], [0], [0, 0, 1, 0], [], []>} : vector<3x7xf32>, vector<256x7xf32>, vector<3x256xf32> -> vector<3x256xf32>
    %3 = vector.extract_strided_slice %2 {offsets = [0, 0], sizes = [1, 256], strides = [1, 1]} : vector<3x256xf32> to vector<1x256xf32>
    %c0_3 = arith.constant 0 : index
    %4 = memref.load %arg1[%c0_3] : memref<3xf32, #tpu.memory_space<smem>>
    %5 = vector.broadcast %4 : f32 to vector<1x256xf32>
    %6 = arith.addf %3, %5 : vector<1x256xf32>
    %c0_4 = arith.constant 0 : index
    %c0_5 = arith.constant 0 : index
    %7 = vector.load %arg4[%c0_4, %c0_5] : memref<3x256xf32, #tpu.memory_space<vmem>>, vector<1x256xf32>
    tpu.vector_store %arg4[%c0_4, %c0_5], %6 {strides = array<i32>} : memref<3x256xf32, #tpu.memory_space<vmem>>, vector<1x256xf32>,
    %8 = vector.extract_strided_slice %2 {offsets = [1, 0], sizes = [1, 256], strides = [1, 1]} : vector<3x256xf32> to vector<1x256xf32>
    %c1 = arith.constant 1 : index
    %9 = memref.load %arg1[%c1] : memref<3xf32, #tpu.memory_space<smem>>
    %10 = vector.broadcast %9 : f32 to vector<1x256xf32>
    %11 = arith.addf %8, %10 : vector<1x256xf32>
    %c1_6 = arith.constant 1 : index
    %c0_7 = arith.constant 0 : index
    %12 = vector.load %arg4[%c1_6, %c0_7] : memref<3x256xf32, #tpu.memory_space<vmem>>, vector<1x256xf32>
    tpu.vector_store %arg4[%c1_6, %c0_7], %11 {strides = array<i32>} : memref<3x256xf32, #tpu.memory_space<vmem>>, vector<1x256xf32>,
    %13 = vector.extract_strided_slice %2 {offsets = [2, 0], sizes = [1, 256], strides = [1, 1]} : vector<3x256xf32> to vector<1x256xf32>
    %c2 = arith.constant 2 : index
    %14 = memref.load %arg1[%c2] : memref<3xf32, #tpu.memory_space<smem>>
    %15 = vector.broadcast %14 : f32 to vector<1x256xf32>
    %16 = arith.addf %13, %15 : vector<1x256xf32>
    %c2_8 = arith.constant 2 : index
    %c0_9 = arith.constant 0 : index
    %17 = vector.load %arg4[%c2_8, %c0_9] : memref<3x256xf32, #tpu.memory_space<vmem>>, vector<1x256xf32>
    tpu.vector_store %arg4[%c2_8, %c0_9], %16 {strides = array<i32>} : memref<3x256xf32, #tpu.memory_space<vmem>>, vector<1x256xf32>,
    return
  }
  func.func @transform_0(%arg0: i32, %arg1: memref<3xf32, #tpu.memory_space<smem>>) -> (i32, i32) {
    %c0_i32 = arith.constant 0 : i32
    %c0_i32_0 = arith.constant 0 : i32
    return %arg0, %c0_i32 : i32, i32
  }
  func.func @transform_1(%arg0: i32, %arg1: memref<3xf32, #tpu.memory_space<smem>>) -> (i32, i32) {
    %c0_i32 = arith.constant 0 : i32
    %c0_i32_0 = arith.constant 0 : i32
    %c0_i32_1 = arith.constant 0 : i32
    return %c0_i32, %c0_i32_0 : i32, i32
  }
  func.func @transform_2(%arg0: i32, %arg1: memref<3xf32, #tpu.memory_space<smem>>) -> (i32, i32) {
    %c0_i32 = arith.constant 0 : i32
    %c0_i32_0 = arith.constant 0 : i32
    return %c0_i32, %arg0 : i32, i32
  }
}

</mosaic_0001>

<llo_original>
// kernel: tpu_custom_call.1
$region0: #{tpu_custom_call.1}
  #allocation0 [shape = 'u32[]', space=smem, size = 0x4, offset = 0x4, fixed_abs, tag = 'smem constant byte address 0x4 - core index']
  #allocation1 [shape = 'u32[144,128]{1,0:T(1,128)}', space=vmem, size = 0x12000, scoped, tag = 'internal scratch']
  #allocation2 [shape = 's32[1]{0}', space=sflag, size = 0x4, scoped, tag = 'scoped memory for tpu_custom_call.1']
  #allocation3 [shape = 'u8[512]{0}', space=smem, size = 0x200, scoped, tag = 'prefetched SMEM operand 0']
  %s0 = inlined_call_operand.vmem [shape: f32[3], index: 0, kind: input, shape index: {}]
  %s1 = inlined_call_operand.vmem [shape: f32[1024,7], index: 1, kind: input, shape index: {}]
  %s2 = inlined_call_operand.vmem [shape: f32[3,7], index: 2, kind: input, shape index: {}]
  %s3 = inlined_call_operand.hbm [shape: f32[3,1024], index: 3, kind: output, shape index: {}]
  %s4 = sld [smem:[#allocation0]]
  $region41: #{tpu_custom_call.1} parent=0
    _
  %s6 = ssub.s32 1, %s4
  %s7 = scalar_select 0, %s6, %s4
  %s8 = sshll.u32 %s0, 4
  %s9 = int_to_ptr.vmem [resolvable:$true] %s8
  %11 = dma.vmem_to_smem %s9, 16, [#allocation3], [#allocation2]
  %12 = dma.done [#allocation2], 16
  %13 = sfence
  $region1: #{tpu_custom_call.1} parent=0
    #allocation4 [shape = 'u8[8192]{0}', space=vmem, size = 0x2000, scoped, tag = 'output window, operand 0']
    #allocation5 [shape = 's32[2]{0}', space=sflag, size = 0x8, scoped, tag = 'scoped memory for tpu_custom_call.1']
    %14 = vsyncpa [#allocation5], 0
    %s15 = scalar_lea.sflag [#allocation5], 1
    %16 = vsyncpa %s15, 0
    loop: start=0, step=1, limit=6
    $region2: #{tpu_custom_call.1} parent=1 // loop_pre_header
      _
    $region3: #{tpu_custom_call.1} parent=1 // loop_header
      %s18 = sphi 0, %s22
      %p19 = scmp.ge.s32.totalorder %s18, 6
      %s28 = sphi 0, %s30
      %s31 = sphi 0, %s28
      %s32 = sphi 0, %s31
      %s48 = sphi 0, %s32
      %s52 = sphi 0, %s52
      %s54 = sphi 0, %s52
      %s55 = sphi 0, %s54
      %s69 = sphi 0, %s55
      %s75 = sphi 0, %s77
      %s78 = sphi 0, %s75
      %s79 = sphi 0, %s78
      %s95 = sphi 0, %s79
    $region4: #{tpu_custom_call.1} parent=1 // loop_header_branch
      %21 = sbr.rel (%p19) target = $region8
    $region5: #{tpu_custom_call.1} parent=1 // loop_body
      %s23 = ssub.s32 %s18, 1
      %s24 = ssub.s32 %s18, 2
      %s25 = sadd.s32 %s18, 1
      %s26 = ssub.s32 %s18, %s25
      %p27 = scmp.eq.s32.totalorder %s26, 0
      %s29 = sadd.s32 %s28, 1
      %s30 = scalar_select %p27, %s28, %s29
      %p33 = pneg %p27
      %p34 = scmp.eq.s32.totalorder %s18, 3
      %p35 = por %p33, %p34
      %p36 = scmp.ne.s32.totalorder %s28, %s31
      %p37 = scmp.eq.s32.totalorder %s18, 0
      %p38 = por %p36, %p37
      %p39 = scmp.ne.s32.totalorder %s28, %s31
      %p40 = scmp.eq.s32.totalorder %s23, 3
      %p41 = por %p39, %p40
      %p42 = scmp.ne.s32.totalorder %s31, %s32
      %p43 = scmp.eq.s32.totalorder %s23, 0
      %p44 = por %p42, %p43
      %p45 = scmp.ne.s32.totalorder %s31, %s32
      %p46 = scmp.eq.s32.totalorder %s24, 3
      %p47 = por %p45, %p46
      %p49 = scmp.ne.s32.totalorder %s32, %s48
      %p50 = scmp.eq.s32.totalorder %s24, 0
      %p51 = por %p49, %p50
      %s53 = sadd.s32 %s52, 1
      %p56 = scmp.eq.s32.totalorder %s18, 3
      %p57 = scmp.ne.s32.totalorder %s52, %s54
      %p58 = scmp.eq.s32.totalorder %s18, 0
      %p59 = por %p57, %p58
      %p60 = scmp.ne.s32.totalorder %s52, %s54
      %p61 = scmp.eq.s32.totalorder %s23, 3
      %p62 = por %p60, %p61
      %p63 = scmp.ne.s32.totalorder %s54, %s55
      %p64 = scmp.eq.s32.totalorder %s23, 0
      %p65 = por %p63, %p64
      %p66 = scmp.ne.s32.totalorder %s54, %s55
      %p67 = scmp.eq.s32.totalorder %s24, 3
      %p68 = por %p66, %p67
      %p70 = scmp.ne.s32.totalorder %s55, %s69
      %p71 = scmp.eq.s32.totalorder %s24, 0
      %p72 = por %p70, %p71
      %s73 = ssub.s32 %s18, %s25
      %p74 = scmp.eq.s32.totalorder %s73, 0
      %s76 = sadd.s32 %s75, 1
      %s77 = scalar_select %p74, %s75, %s76
      %p80 = pneg %p74
      %p81 = scmp.eq.s32.totalorder %s18, 3
      %p82 = por %p80, %p81
      %p83 = scmp.ne.s32.totalorder %s75, %s78
      %p84 = scmp.eq.s32.totalorder %s18, 0
      %p85 = por %p83, %p84
      %p86 = scmp.ne.s32.totalorder %s75, %s78
      %p87 = scmp.eq.s32.totalorder %s23, 3
      %p88 = por %p86, %p87
      %p89 = scmp.ne.s32.totalorder %s78, %s79
      %p90 = scmp.eq.s32.totalorder %s23, 0
      %p91 = por %p89, %p90
      %p92 = scmp.ne.s32.totalorder %s78, %s79
      %p93 = scmp.eq.s32.totalorder %s24, 3
      %p94 = por %p92, %p93
      %p96 = scmp.ne.s32.totalorder %s79, %s95
      %p97 = scmp.eq.s32.totalorder %s24, 0
      %p98 = por %p96, %p97
      %p99 = scmp.le.s32.totalorder 1, %s18
      %p100 = scmp.lt.s32.totalorder %s18, 5
      %p101 = pnand %p99, %p100
      %p102 = pneg %p101
      // Predicated region
      $region9: #{tpu_custom_call.1} parent=5 // pred_check
        _
      $region10: #{tpu_custom_call.1} parent=5 // pred_check_branch
        %104 = sbr.rel (%p101) target = $region12
      $region11: #{tpu_custom_call.1} parent=5 // pred_region
        %s105 = ssub.s32 %s18, 1
        // Predicated region
        $region13: #{tpu_custom_call.1} parent=11 // pred_check
          %p106 = pneg %p65
        $region14: #{tpu_custom_call.1} parent=11 // pred_check_branch
          %108 = sbr.rel (%p106) target = $region16
        $region15: #{tpu_custom_call.1} parent=11 // pred_region
          _
        $region16: #{tpu_custom_call.1} parent=11 // pred_fallthru
          _
      $region12: #{tpu_custom_call.1} parent=5 // pred_fallthru
        _
      %p109 = scmp.lt.s32.totalorder %s18, 4
      // Predicated region
      $region17: #{tpu_custom_call.1} parent=5 // pred_check
        %p110 = pneg %p109
      $region18: #{tpu_custom_call.1} parent=5 // pred_check_branch
        %112 = sbr.rel (%p110) target = $region20
      $region19: #{tpu_custom_call.1} parent=5 // pred_region
        // Predicated region
        $region21: #{tpu_custom_call.1} parent=19 // pred_check
          %p113 = pneg %p38
        $region22: #{tpu_custom_call.1} parent=19 // pred_check_branch
          %115 = sbr.rel (%p113) target = $region24
        $region23: #{tpu_custom_call.1} parent=19 // pred_region
          %s116 = smul.u32 32, %s18
          %p117 = scmp.lt.s32.totalorder %s116, 127
          %s118 = scalar_select %p117, %s116, 127
          %s119 = smul.addr %s118, 8
          %s120 = scalar_lea.vmem %s1, %s119
          %s121 = smul.u32 32, %s18
        $region24: #{tpu_custom_call.1} parent=19 // pred_fallthru
          _
      $region20: #{tpu_custom_call.1} parent=5 // pred_fallthru
        _
      %p122 = scmp.le.s32.totalorder 1, %s18
      %p123 = scmp.lt.s32.totalorder %s18, 5
      %p124 = pnand %p122, %p123
      %p125 = pneg %p124
      // Predicated region
      $region25: #{tpu_custom_call.1} parent=5 // pred_check
        _
      $region26: #{tpu_custom_call.1} parent=5 // pred_check_branch
        %127 = sbr.rel (%p124) target = $region28
      $region27: #{tpu_custom_call.1} parent=5 // pred_region
        %s128 = ssub.s32 %s18, 1
        %s129 = smul.u32 32, %s23
        %p130 = scmp.lt.s32.totalorder %s129, 127
        %s131 = scalar_select %p130, %s129, 127
        %s132 = smul.addr %s131, 8
        %s133 = scalar_lea.vmem %s1, %s132
        %p134 = pneg %p44
        %p135 = pneg %p41
        %p136 = pneg %p65
        %p137 = pneg %p62
        %p138 = pneg %p91
        %p139 = pneg %p88
        %s140 = sand.u32 %s78, 1
        %s141 = scalar_lea.sflag [#allocation5], %s140
        %s142 = sand.u32 %s78, 1
        %s143 = smul.addr %s142, 8
        %s144 = scalar_lea.vmem [#allocation4], %s143
        %s145 = smul.u32 32, %s23
        %p146 = scmp.lt.s32.totalorder %s145, 127
        %s147 = scalar_select %p146, %s145, 127
        %s148 = smul.addr %s147, 8
        %s149 = scalar_lea.vmem %s1, %s148
        %s150 = smul.u32 32, %s23
        %s151 = smul.u32 2, %s23
        %v152 = vld [vmem:[%s149] sm:$0xff]
        %v153 = vld [vmem:[%s149 + $0x8] sm:$0xff]
        %v154 = vld [vmem:[%s149 + $0x10] sm:$0xff]
        %v155 = vld [vmem:[%s149 + $0x18] sm:$0xff]
        %v156 = vld [vmem:[%s149 + $0x20] sm:$0xff]
        %v157 = vld [vmem:[%s149 + $0x28] sm:$0xff]
        %v158 = vld [vmem:[%s149 + $0x30] sm:$0xff]
        %v159 = vld [vmem:[%s149 + $0x38] sm:$0xff]
        %v160 = vld [vmem:[%s149 + $0x40] sm:$0xff]
        %v161 = vld [vmem:[%s149 + $0x48] sm:$0xff]
        %v162 = vld [vmem:[%s149 + $0x50] sm:$0xff]
        %v163 = vld [vmem:[%s149 + $0x58] sm:$0xff]
        %v164 = vld [vmem:[%s149 + $0x60] sm:$0xff]
        %v165 = vld [vmem:[%s149 + $0x68] sm:$0xff]
        %v166 = vld [vmem:[%s149 + $0x70] sm:$0xff]
        %v167 = vld [vmem:[%s149 + $0x78] sm:$0xff]
        %v168 = vld [vmem:[%s149 + $0x80] sm:$0xff]
        %v169 = vld [vmem:[%s149 + $0x88] sm:$0xff]
        %v170 = vld [vmem:[%s149 + $0x90] sm:$0xff]
        %v171 = vld [vmem:[%s149 + $0x98] sm:$0xff]
        %v172 = vld [vmem:[%s149 + $0xa0] sm:$0xff]
        %v173 = vld [vmem:[%s149 + $0xa8] sm:$0xff]
        %v174 = vld [vmem:[%s149 + $0xb0] sm:$0xff]
        %v175 = vld [vmem:[%s149 + $0xb8] sm:$0xff]
        %v176 = vld [vmem:[%s149 + $0xc0] sm:$0xff]
        %v177 = vld [vmem:[%s149 + $0xc8] sm:$0xff]
        %v178 = vld [vmem:[%s149 + $0xd0] sm:$0xff]
        %v179 = vld [vmem:[%s149 + $0xd8] sm:$0xff]
        %v180 = vld [vmem:[%s149 + $0xe0] sm:$0xff]
        %v181 = vld [vmem:[%s149 + $0xe8] sm:$0xff]
        %v182 = vld [vmem:[%s149 + $0xf0] sm:$0xff]
        %v183 = vld [vmem:[%s149 + $0xf8] sm:$0xff]
        %v184 = vld [vmem:[%s2] sm:$0x7]
        %vm185 = vcmask 56320
        %v187 = vsel %vm185, %v184, 0
        %v190 = vsel %vm185, %v152, 0
        %v193 = vsel %vm185, %v153, 0
        %v196 = vsel %vm185, %v154, 0
        %v199 = vsel %vm185, %v155, 0
        %v202 = vsel %vm185, %v156, 0
        %v205 = vsel %vm185, %v157, 0
        %v208 = vsel %vm185, %v158, 0
        %v211 = vsel %vm185, %v159, 0
        %v214 = vsel %vm185, %v160, 0
        %v217 = vsel %vm185, %v161, 0
        %v220 = vsel %vm185, %v162, 0
        %v223 = vsel %vm185, %v163, 0
        %v226 = vsel %vm185, %v164, 0
        %v229 = vsel %vm185, %v165, 0
        %v232 = vsel %vm185, %v166, 0
        %v235 = vsel %vm185, %v167, 0
        %v238 = vsel %vm185, %v168, 0
        %v241 = vsel %vm185, %v169, 0
        %v244 = vsel %vm185, %v170, 0
        %v247 = vsel %vm185, %v171, 0
        %v250 = vsel %vm185, %v172, 0
        %v253 = vsel %vm185, %v173, 0
        %v256 = vsel %vm185, %v174, 0
        %v259 = vsel %vm185, %v175, 0
        %v262 = vsel %vm185, %v176, 0
        %v265 = vsel %vm185, %v177, 0
        %v268 = vsel %vm185, %v178, 0
        %v271 = vsel %vm185, %v179, 0
        %v274 = vsel %vm185, %v180, 0
        %v277 = vsel %vm185, %v181, 0
        %v280 = vsel %vm185, %v182, 0
        %v283 = vsel %vm185, %v183, 0
        %285 = vmatprep.subr.mxu0 0.0
        %286 = vmatpush1.xpose.msra.mxu0 %v190
        %287 = vmatprep.subr.mxu0 0.0
        %288 = vmatpush1.xpose.msra.mxu0 %v193
        %289 = vmatprep.subr.mxu0 0.0
        %290 = vmatpush1.xpose.msra.mxu0 %v196
        %291 = vmatprep.subr.mxu0 0.0
        %292 = vmatpush1.xpose.msra.mxu0 %v199
        %293 = vmatprep.subr.mxu0 0.0
        %294 = vmatpush1.xpose.msra.mxu0 %v202
        %295 = vmatprep.subr.mxu0 0.0
        %296 = vmatpush1.xpose.msra.mxu0 %v205
        %297 = vmatprep.subr.mxu0 0.0
        %298 = vmatpush1.xpose.msra.mxu0 %v208
        %299 = vmatprep.subr.mxu0 0.0
        %300 = vmatpush1.xpose.msra.mxu0 %v211
        %301 = vmatprep.subr.mxu0 0.0
        %302 = vmatpush1.xpose.msra.mxu0 %v214
        %303 = vmatprep.subr.mxu0 0.0
        %304 = vmatpush1.xpose.msra.mxu0 %v217
        %305 = vmatprep.subr.mxu0 0.0
        %306 = vmatpush1.xpose.msra.mxu0 %v220
        %307 = vmatprep.subr.mxu0 0.0
        %308 = vmatpush1.xpose.msra.mxu0 %v223
        %309 = vmatprep.subr.mxu0 0.0
        %310 = vmatpush1.xpose.msra.mxu0 %v226
        %311 = vmatprep.subr.mxu0 0.0
        %312 = vmatpush1.xpose.msra.mxu0 %v229
        %313 = vmatprep.subr.mxu0 0.0
        %314 = vmatpush1.xpose.msra.mxu0 %v232
        %315 = vmatprep.subr.mxu0 0.0
        %316 = vmatpush1.xpose.msra.mxu0 %v235
        %317 = vmatprep.subr.mxu0 0.0
        %318 = vmatpush1.xpose.msra.mxu0 %v238
        %319 = vmatprep.subr.mxu0 0.0
        %320 = vmatpush1.xpose.msra.mxu0 %v241
        %321 = vmatprep.subr.mxu0 0.0
        %322 = vmatpush1.xpose.msra.mxu0 %v244
        %323 = vmatprep.subr.mxu0 0.0
        %324 = vmatpush1.xpose.msra.mxu0 %v247
        %325 = vmatprep.subr.mxu0 0.0
        %326 = vmatpush1.xpose.msra.mxu0 %v250
        %327 = vmatprep.subr.mxu0 0.0
        %328 = vmatpush1.xpose.msra.mxu0 %v253
        %329 = vmatprep.subr.mxu0 0.0
        %330 = vmatpush1.xpose.msra.mxu0 %v256
        %331 = vmatprep.subr.mxu0 0.0
        %332 = vmatpush1.xpose.msra.mxu0 %v259
        %333 = vmatprep.subr.mxu0 0.0
        %334 = vmatpush1.xpose.msra.mxu0 %v262
        %335 = vmatprep.subr.mxu0 0.0
        %336 = vmatpush1.xpose.msra.mxu0 %v265
        %337 = vmatprep.subr.mxu0 0.0
        %338 = vmatpush1.xpose.msra.mxu0 %v268
        %339 = vmatprep.subr.mxu0 0.0
        %340 = vmatpush1.xpose.msra.mxu0 %v271
        %341 = vmatprep.subr.mxu0 0.0
        %342 = vmatpush1.xpose.msra.mxu0 %v274
        %343 = vmatprep.subr.mxu0 0.0
        %344 = vmatpush1.xpose.msra.mxu0 %v277
        %345 = vmatprep.subr.mxu0 0.0
        %346 = vmatpush1.xpose.msra.mxu0 %v280
        %347 = vmatprep.subr.mxu0 0.0
        %348 = vmatpush1.xpose.msra.mxu0 %v283
        %349 = vmatprep.mubr.f32.mxu0 0.0
        %350 = vmatmul.mubr.f32.gmra.mrb[0].mxu0 %v187
        %v351 = vpop.f32.mrb[0].mxu0
        %v352 = vadd.f32 0.0, %v351
        %v353 = vpop.f32.mrb[0].mxu0
        %v354 = vadd.f32 0.0, %v353
        %355 = vdwg.mxu0
        %s356 = sld [smem:[#allocation3]]
        %v357 = vstv %s356
        %v358 = vadd.f32 %v352, %v357
        %v359 = vadd.f32 %v354, %v357
        %v362 = vcombine.low %v358, %v359
        %v364 = vunpack.c.l.s4 1966171168
        %v365 = vunpack.c.0.s8 %v364
        %v366 = vlaneseq
        %v367 = vshrl.u32 %v366, 7
        %v368 = vsub.s32 %v365, %v367
        %v369 = vrot.slane %v362, %v368
        %v371 = vunpack.c.l.s4 1966171168
        %v372 = vunpack.c.0.s8 %v371
        %v373 = vlaneseq
        %v374 = vshrl.u32 %v373, 7
        %v375 = vsub.s32 %v372, %v374
        %v376 = vrot.slane %v369, %v375
        %v378 = vlaneseq
        %vm379 = vcmp.ge.s32.totalorder %v378, 0
        %vm380 = vcmp.lt.s32.totalorder %v378, 256
        %vm381 = vmand %vm379, %vm380
        %382 = vst.msk [vmem:[%s144] ss:$4 sm:$0x3] %vm381, %v376
        %s383 = sld [smem:[#allocation3 + $0x1]]
        %v384 = vstv %s383
        %v385 = vadd.f32 %v352, %v384
        %v386 = vadd.f32 %v354, %v384
        %v389 = vcombine.low %v385, %v386
        %v391 = vunpack.c.l.s4 1966171168
        %v392 = vunpack.c.0.s8 %v391
        %v393 = vlaneseq
        %v394 = vshrl.u32 %v393, 7
        %v395 = vsub.s32 %v392, %v394
        %v396 = vrot.slane %v389, %v395
        %v397 = vcombine.high %v396, %v396
        %v399 = vunpack.c.l.s4 1966171168
        %v400 = vunpack.c.0.s8 %v399
        %v401 = vlaneseq
        %v402 = vshrl.u32 %v401, 7
        %v403 = vsub.s32 %v400, %v402
        %v404 = vrot.slane %v397, %v403
        %s406 = scalar_lea.vmem %s144, 1 [#allocation4]
        %407 = vst.msk [vmem:[%s406] ss:$4 sm:$0x3] %vm381, %v404
        %s408 = sld [smem:[#allocation3 + $0x2]]
        %v409 = vstv %s408
        %v410 = vadd.f32 %v352, %v409
        %v411 = vadd.f32 %v354, %v409
        %v414 = vcombine.low %v410, %v411
        %v416 = vunpack.c.l.s4 1966171168
        %v417 = vunpack.c.0.s8 %v416
        %v418 = vlaneseq
        %v419 = vshrl.u32 %v418, 7
        %v420 = vsub.s32 %v417, %v419
        %v421 = vrot.slane %v414, %v420
        %v423 = vunpack.c.l.s4 1966171168
        %v424 = vunpack.c.0.s8 %v423
        %v425 = vlaneseq
        %v426 = vshrl.u32 %v425, 7
        %v427 = vsub.s32 %v424, %v426
        %v428 = vrot.slane %v421, %v427
        %v429 = vcombine.high %v428, %v428
        %s431 = scalar_lea.vmem %s144, 2 [#allocation4]
        %432 = vst.msk [vmem:[%s431] ss:$4 sm:$0x3] %vm381, %v429
        %s433 = sand.u32 %s78, 1
        %s434 = scalar_lea.sflag [#allocation5], %s433
        %s435 = sand.u32 %s78, 1
        %s436 = smul.addr %s435, 8
        %s437 = scalar_lea.vmem [#allocation4], %s436
        // Predicated region
        $region29: #{tpu_custom_call.1} parent=27 // pred_check
          %p438 = pneg %p88
        $region30: #{tpu_custom_call.1} parent=27 // pred_check_branch
          %440 = sbr.rel (%p438) target = $region32
        $region31: #{tpu_custom_call.1} parent=27 // pred_region
          %s441 = smul.u32 2, %s23
          %s443 = ssub.s32 128, 128
          %444 = vsyncadd %s434, %s443
          %s445 = smul.addr %s441, 64
          %s446 = scalar_lea.hbm %s3, %s445
          %s448 = sshll.u32 %s437, 4
          %s449 = int_to_ptr.vmem [resolvable:$true] %s448
          %451 = dma.vmem_to_hbm [thread:$0]  %s449, 128, %s446, %s434
        $region32: #{tpu_custom_call.1} parent=27 // pred_fallthru
          _
      $region28: #{tpu_custom_call.1} parent=5 // pred_fallthru
        _
      %p452 = scmp.le.s32.totalorder 2, %s18
      // Predicated region
      $region33: #{tpu_custom_call.1} parent=5 // pred_check
        %p453 = pneg %p452
      $region34: #{tpu_custom_call.1} parent=5 // pred_check_branch
        %455 = sbr.rel (%p453) target = $region36
      $region35: #{tpu_custom_call.1} parent=5 // pred_region
        %s456 = ssub.s32 %s18, 2
        // Predicated region
        $region37: #{tpu_custom_call.1} parent=35 // pred_check
          %p457 = pneg %p94
        $region38: #{tpu_custom_call.1} parent=35 // pred_check_branch
          %459 = sbr.rel (%p457) target = $region40
        $region39: #{tpu_custom_call.1} parent=35 // pred_region
          %s460 = sand.u32 %s79, 1
          %s461 = scalar_lea.sflag [#allocation5], %s460
          %s462 = sand.u32 %s79, 1
          %s463 = smul.addr %s462, 8
          %s464 = scalar_lea.vmem [#allocation4], %s463
          %465 = dma.done %s461, 128
        $region40: #{tpu_custom_call.1} parent=35 // pred_fallthru
          _
      $region36: #{tpu_custom_call.1} parent=5 // pred_fallthru
        _
    $region6: #{tpu_custom_call.1} parent=1 // loop_footer
      %s22 = sadd.s32 1, %s18
    $region7: #{tpu_custom_call.1} parent=1 // loop_footer_branch
      %17 = sbr.rel target = $region3
    $region8: #{tpu_custom_call.1} parent=1 // loop_exit
      _
    %466 = vsyncpa [#allocation5], 1
    %s467 = scalar_lea.sflag [#allocation5], 1
    %468 = vsyncpa %s467, 1

</llo_original>
